<compile_context>
chip_gen: v7x
topology: tpu7x:2x2x1
jax: 0.10.0
libtpu: 0.0.40
codegen_flags: <defaults>
</compile_context>

<pallas_src>
import math

import jax
import jax.numpy as jnp
from jax.experimental import pallas as pl
from jax.experimental.pallas import tpu as pltpu

# ---- problem sizes (small, consistent with the module) ----
BATCH = 2
SEQ = 8
D_MODEL = 32
D_FFN = 128          # typical 4x expansion; multiple of 128 -> lane-dense intermediate
D_PAD = 128          # padded model dim for lane-dense I/O and a full MXU column

_GELU_C = math.sqrt(2.0 / math.pi)


def _gelu_tanh(h):
    # tanh-approx GELU in f32 (tanh routes to the EUP slot).
    # TODO(synk): PyTorch nn.GELU() default is the exact erf form; the tanh
    # approximation (max abs diff ~1e-3) is used to stay on guaranteed Mosaic
    # element-wise lowerings.  The in-script reference uses the same form.
    return 0.5 * h * (1.0 + jnp.tanh(_GELU_C * (h + 0.044715 * h * h * h)))


def ffn_kernel(x_ref, w1_ref, b1_ref, w2_ref, b2_ref, out_ref):
    """Whole problem resident in VMEM; no grid, no pipeline machinery."""
    x = x_ref[...]                                                    # (N, 128) bf16
    # MXU matmul #1 (bf16 x bf16 -> f32 accumulate), bias + GELU in f32.
    h = jnp.dot(x, w1_ref[...], preferred_element_type=jnp.float32)  # (N, F) f32
    h = h + b1_ref[...]
    g = _gelu_tanh(h)                                                 # (N, F) f32
    # MXU matmul #2: cast activation to bf16 for a single-pass MXU op.
    y = jnp.dot(g.astype(jnp.bfloat16), w2_ref[...],
                preferred_element_type=jnp.float32)                   # (N, 128) f32
    out_ref[...] = y + b2_ref[...]
    # TODO(synk): nn.Dropout(p=0.1) skipped (deterministic / eval mode).


def pointwise_feed_forward(x, params):
    """x: (B, S, D_MODEL) float32.  Returns (B, S, D_MODEL) float32."""
    B, S, D = x.shape
    N = B * S
    w1, b1 = params["w1"], params["b1"]      # (D, F), (1, F)
    w2, b2 = params["w2"], params["b2"]      # (F, D), (1, D)
    F = w1.shape[1]

    # ---- wrapper-side layout: zero-pad the model dim to 128 lanes ----
    x2d = jnp.zeros((N, D_PAD), jnp.float32).at[:, :D].set(x.reshape(N, D))
    w1p = jnp.zeros((D_PAD, F), jnp.float32).at[:D, :].set(w1)   # pad rows = 0
    w2p = jnp.zeros((F, D_PAD), jnp.float32).at[:, :D].set(w2)   # pad out-cols = 0
    b2p = jnp.zeros((1, D_PAD), jnp.float32).at[:, :D].set(b2)

    # bf16 MXU operands; biases / epilogue stay f32.
    x_bf = x2d.astype(jnp.bfloat16)
    w1_bf = w1p.astype(jnp.bfloat16)
    w2_bf = w2p.astype(jnp.bfloat16)

    vmem = pl.BlockSpec(memory_space=pltpu.MemorySpace.VMEM)
    out2d = pl.pallas_call(
        ffn_kernel,
        out_shape=jax.ShapeDtypeStruct((N, D_PAD), jnp.float32),
        in_specs=[vmem, vmem, vmem, vmem, vmem],
        out_specs=vmem,
    )(x_bf, w1_bf, b1, w2_bf, b2p)

    # Slice the padded output columns back off outside the kernel.
    return out2d[:, :D].reshape(B, S, D)


def init_params(key, d_model, d_ffn):
    """Deterministic xavier-normal-ish init.  Weights stored as (in, out)."""
    k1, k2, k3, k4 = jax.random.split(key, 4)
    std1 = math.sqrt(2.0 / (d_model + d_ffn))
    std2 = math.sqrt(2.0 / (d_ffn + d_model))
    w1 = jax.random.normal(k1, (d_model, d_ffn), jnp.float32) * std1
    b1 = jax.random.normal(k2, (1, d_ffn), jnp.float32) * 0.01
    w2 = jax.random.normal(k3, (d_ffn, d_model), jnp.float32) * std2
    b2 = jax.random.normal(k4, (1, d_model), jnp.float32) * 0.01
    return dict(w1=w1, b1=b1, w2=w2, b2=b2)


def reference(x, params):
    """Pure-JAX f32 reference mirroring the PyTorch forward (dropout = eval mode)."""
    h = x @ params["w1"] + params["b1"]
    g = jax.nn.gelu(h, approximate=True)     # same tanh form as the kernel
    return g @ params["w2"] + params["b2"]


if __name__ == "__main__":
    key = jax.random.PRNGKey(0)
    kx, kp = jax.random.split(key)
    x = jax.random.normal(kx, (BATCH, SEQ, D_MODEL), jnp.float32)
    params = init_params(kp, D_MODEL, D_FFN)

    out = jax.jit(pointwise_feed_forward)(x, params)
    out = jax.block_until_ready(out)

    out_ref = reference(x, params)
    assert out.shape == (BATCH, SEQ, D_MODEL)
    # bf16 MXU operands vs pure-f32 reference -> relaxed tolerance.
    err = float(jnp.max(jnp.abs(out - out_ref)))
    assert jnp.allclose(out, out_ref, atol=3e-2, rtol=3e-2), err

    print("KERNEL_OK")
</pallas_src>

<mosaic_0001>
module attributes {stable_mosaic.version = 11 : i64} {
  func.func @ffn_kernel(%arg0: memref<16x128xbf16, #tpu.memory_space<vmem>>, %arg1: memref<128x128xbf16, #tpu.memory_space<vmem>>, %arg2: memref<1x128xf32, #tpu.memory_space<vmem>>, %arg3: memref<128x128xbf16, #tpu.memory_space<vmem>>, %arg4: memref<1x128xf32, #tpu.memory_space<vmem>>, %arg5: memref<16x128xf32, #tpu.memory_space<vmem>>) attributes {dimension_semantics = [], scalar_prefetch = 0 : i64, scratch_operands = 0 : i64, tpu.core_type = #tpu.core_type<tc>} {
    %c0 = arith.constant 0 : index
    %c0_0 = arith.constant 0 : index
    %0 = vector.load %arg0[%c0, %c0_0] : memref<16x128xbf16, #tpu.memory_space<vmem>>, vector<16x128xbf16>
    %c0_1 = arith.constant 0 : index
    %c0_2 = arith.constant 0 : index
    %1 = vector.load %arg1[%c0_1, %c0_2] : memref<128x128xbf16, #tpu.memory_space<vmem>>, vector<128x128xbf16>
    %cst = arith.constant dense<0.000000e+00> : vector<16x128xf32>
    %2 = tpu.matmul %0, %1, %cst {dimension_numbers = #tpu.dot_dimension_numbers<[1], [0], [0], [1], [0, 0, 1, 1], [], []>} : vector<16x128xbf16>, vector<128x128xbf16>, vector<16x128xf32> -> vector<16x128xf32>
    %c0_3 = arith.constant 0 : index
    %c0_4 = arith.constant 0 : index
    %3 = vector.load %arg2[%c0_3, %c0_4] : memref<1x128xf32, #tpu.memory_space<vmem>>, vector<1x128xf32>
    %4 = vector.broadcast %3 : vector<1x128xf32> to vector<16x128xf32>
    %5 = arith.addf %2, %4 : vector<16x128xf32>
    %cst_5 = arith.constant 5.000000e-01 : f32
    %6 = vector.broadcast %cst_5 : f32 to vector<16x128xf32>
    %7 = arith.mulf %6, %5 : vector<16x128xf32>
    %cst_6 = arith.constant 4.471500e-02 : f32
    %8 = vector.broadcast %cst_6 : f32 to vector<16x128xf32>
    %9 = arith.mulf %8, %5 : vector<16x128xf32>
    %10 = arith.mulf %9, %5 : vector<16x128xf32>
    %11 = arith.mulf %10, %5 : vector<16x128xf32>
    %12 = arith.addf %5, %11 : vector<16x128xf32>
    %cst_7 = arith.constant 0.797884583 : f32
    %13 = vector.broadcast %cst_7 : f32 to vector<16x128xf32>
    %14 = arith.mulf %13, %12 : vector<16x128xf32>
    %15 = math.tanh %14 : vector<16x128xf32>
    %cst_8 = arith.constant 1.000000e+00 : f32
    %16 = vector.broadcast %cst_8 : f32 to vector<16x128xf32>
    %17 = arith.addf %16, %15 : vector<16x128xf32>
    %18 = arith.mulf %7, %17 : vector<16x128xf32>
    %19 = arith.truncf %18 : vector<16x128xf32> to vector<16x128xbf16>
    %c0_9 = arith.constant 0 : index
    %c0_10 = arith.constant 0 : index
    %20 = vector.load %arg3[%c0_9, %c0_10] : memref<128x128xbf16, #tpu.memory_space<vmem>>, vector<128x128xbf16>
    %cst_11 = arith.constant dense<0.000000e+00> : vector<16x128xf32>
    %21 = tpu.matmul %19, %20, %cst_11 {dimension_numbers = #tpu.dot_dimension_numbers<[1], [0], [0], [1], [0, 0, 1, 1], [], []>} : vector<16x128xbf16>, vector<128x128xbf16>, vector<16x128xf32> -> vector<16x128xf32>
    %c0_12 = arith.constant 0 : index
    %c0_13 = arith.constant 0 : index
    %22 = vector.load %arg4[%c0_12, %c0_13] : memref<1x128xf32, #tpu.memory_space<vmem>>, vector<1x128xf32>
    %23 = vector.broadcast %22 : vector<1x128xf32> to vector<16x128xf32>
    %24 = arith.addf %21, %23 : vector<16x128xf32>
    %c0_14 = arith.constant 0 : index
    %c0_15 = arith.constant 0 : index
    %25 = vector.load %arg5[%c0_14, %c0_15] : memref<16x128xf32, #tpu.memory_space<vmem>>, vector<16x128xf32>
    tpu.vector_store %arg5[%c0_14, %c0_15], %24 {strides = array<i32>} : memref<16x128xf32, #tpu.memory_space<vmem>>, vector<16x128xf32>,
    return
  }
}

</mosaic_0001>

<llo_original>
// kernel: pointwise_feed_forward.1
$region0: #{pointwise_feed_forward.1}
  #allocation0 [shape = 'u32[]', space=smem, size = 0x4, offset = 0x4, fixed_abs, tag = 'smem constant byte address 0x4 - core index']
  #allocation1 [shape = 'u32[144,128]{1,0:T(1,128)}', space=vmem, size = 0x12000, scoped, tag = 'internal scratch']
  %s0 = inlined_call_operand.vmem [shape: bf16[16,128], index: 0, kind: input, shape index: {}]
  %s1 = inlined_call_operand.vmem [shape: bf16[128,128], index: 1, kind: input, shape index: {}]
  %s2 = inlined_call_operand.vmem [shape: f32[1,128], index: 2, kind: input, shape index: {}]
  %s3 = inlined_call_operand.vmem [shape: bf16[128,128], index: 3, kind: input, shape index: {}]
  %s4 = inlined_call_operand.vmem [shape: f32[1,128], index: 4, kind: input, shape index: {}]
  %s5 = inlined_call_operand.vmem [shape: f32[16,128], index: 5, kind: output, shape index: {}]
  %s6 = sld [smem:[#allocation0]]
  $region30: #{pointwise_feed_forward.1} parent=0
    _
  %s8 = ssub.s32 1, %s6
  %s9 = scalar_select 0, %s8, %s6
  // Predicated region
  $region2: #{pointwise_feed_forward.1} parent=0 // pred_check
    _
  $region3: #{pointwise_feed_forward.1} parent=0 // pred_check_branch
    %11 = sbr.rel (0) target = $region5
  $region4: #{pointwise_feed_forward.1} parent=0 // pred_region
    _
  $region5: #{pointwise_feed_forward.1} parent=0 // pred_fallthru
    _
  // Predicated region
  $region6: #{pointwise_feed_forward.1} parent=0 // pred_check
    _
  $region7: #{pointwise_feed_forward.1} parent=0 // pred_check_branch
    %13 = sbr.rel (0) target = $region9
  $region8: #{pointwise_feed_forward.1} parent=0 // pred_region
    _
  $region9: #{pointwise_feed_forward.1} parent=0 // pred_fallthru
    _
  // Predicated region
  $region10: #{pointwise_feed_forward.1} parent=0 // pred_check
    _
  $region11: #{pointwise_feed_forward.1} parent=0 // pred_check_branch
    %15 = sbr.rel (0) target = $region13
  $region12: #{pointwise_feed_forward.1} parent=0 // pred_region
    _
  $region13: #{pointwise_feed_forward.1} parent=0 // pred_fallthru
    _
  // Predicated region
  $region14: #{pointwise_feed_forward.1} parent=0 // pred_check
    _
  $region15: #{pointwise_feed_forward.1} parent=0 // pred_check_branch
    %17 = sbr.rel (0) target = $region17
  $region16: #{pointwise_feed_forward.1} parent=0 // pred_region
    _
  $region17: #{pointwise_feed_forward.1} parent=0 // pred_fallthru
    _
  // Predicated region
  $region18: #{pointwise_feed_forward.1} parent=0 // pred_check
    _
  $region19: #{pointwise_feed_forward.1} parent=0 // pred_check_branch
    %19 = sbr.rel (0) target = $region21
  $region20: #{pointwise_feed_forward.1} parent=0 // pred_region
    _
  $region21: #{pointwise_feed_forward.1} parent=0 // pred_fallthru
    _
  %v21 = vld [vmem:[%s0] sm:$0xf]
  %v22 = vld [vmem:[%s0 + $0x4] sm:$0xf]
  %v23 = vld [vmem:[%s1] sm:$0xf]
  %v24 = vld [vmem:[%s1 + $0x4] sm:$0xf]
  %v25 = vld [vmem:[%s1 + $0x8] sm:$0xf]
  %v26 = vld [vmem:[%s1 + $0xc] sm:$0xf]
  %v27 = vld [vmem:[%s1 + $0x10] sm:$0xf]
  %v28 = vld [vmem:[%s1 + $0x14] sm:$0xf]
  %v29 = vld [vmem:[%s1 + $0x18] sm:$0xf]
  %v30 = vld [vmem:[%s1 + $0x1c] sm:$0xf]
  %v31 = vld [vmem:[%s1 + $0x20] sm:$0xf]
  %v32 = vld [vmem:[%s1 + $0x24] sm:$0xf]
  %v33 = vld [vmem:[%s1 + $0x28] sm:$0xf]
  %v34 = vld [vmem:[%s1 + $0x2c] sm:$0xf]
  %v35 = vld [vmem:[%s1 + $0x30] sm:$0xf]
  %v36 = vld [vmem:[%s1 + $0x34] sm:$0xf]
  %v37 = vld [vmem:[%s1 + $0x38] sm:$0xf]
  %v38 = vld [vmem:[%s1 + $0x3c] sm:$0xf]
  %v39 = vld [vmem:[%s2] sm:$0x1]
  %v41 = vlaneseq
  %v42 = vshrl.u32 %v41, 7
  %v43 = vsub.s32 0, %v42
  %v44 = vrot.slane %v39, %v43
  %v48 = vunpack.c.l.b16 %v21
  %v49 = vunpack.c.l.b16 %v22
  %v50 = vpack.c.b16 %v49, %v48
  %v68 = vunpack.c.l.b16 %v23
  %v69 = vunpack.c.l.b16 %v24
  %v70 = vunpack.c.l.b16 %v25
  %v71 = vunpack.c.l.b16 %v26
  %v72 = vunpack.c.l.b16 %v27
  %v73 = vunpack.c.l.b16 %v28
  %v74 = vunpack.c.l.b16 %v29
  %v75 = vunpack.c.l.b16 %v30
  %v76 = vunpack.c.l.b16 %v31
  %v77 = vunpack.c.l.b16 %v32
  %v78 = vunpack.c.l.b16 %v33
  %v79 = vunpack.c.l.b16 %v34
  %v80 = vunpack.c.l.b16 %v35
  %v81 = vunpack.c.l.b16 %v36
  %v82 = vunpack.c.l.b16 %v37
  %v83 = vunpack.c.l.b16 %v38
  %v84 = vpack.c.b16 %v69, %v68
  %v85 = vpack.c.b16 %v71, %v70
  %v86 = vpack.c.b16 %v73, %v72
  %v87 = vpack.c.b16 %v75, %v74
  %v88 = vpack.c.b16 %v77, %v76
  %v89 = vpack.c.b16 %v79, %v78
  %v90 = vpack.c.b16 %v81, %v80
  %v91 = vpack.c.b16 %v83, %v82
  %100 = vmatprep.subr.bf16.mxu0 0
  %101 = vmatpush1.bf16.msra.mxu0 %v84
  %102 = vmatprep.subr.bf16.mxu0 0
  %103 = vmatpush1.bf16.msra.mxu0 %v85
  %104 = vmatprep.subr.bf16.mxu0 0
  %105 = vmatpush1.bf16.msra.mxu0 %v86
  %106 = vmatprep.subr.bf16.mxu0 0
  %107 = vmatpush1.bf16.msra.mxu0 %v87
  %108 = vmatprep.subr.bf16.mxu0 0
  %109 = vmatpush1.bf16.msra.mxu0 %v88
  %110 = vmatprep.subr.bf16.mxu0 0
  %111 = vmatpush1.bf16.msra.mxu0 %v89
  %112 = vmatprep.subr.bf16.mxu0 0
  %113 = vmatpush1.bf16.msra.mxu0 %v90
  %114 = vmatprep.subr.bf16.mxu0 0
  %115 = vmatpush1.bf16.msra.mxu0 %v91
  %116 = vmatprep.subr.bf16.mxu0 0
  %117 = vmatpush1.bf16.msra.mxu0 0
  %118 = vmatprep.subr.bf16.mxu0 0
  %119 = vmatpush1.bf16.msra.mxu0 0
  %120 = vmatprep.subr.bf16.mxu0 0
  %121 = vmatpush1.bf16.msra.mxu0 0
  %122 = vmatprep.subr.bf16.mxu0 0
  %123 = vmatpush1.bf16.msra.mxu0 0
  %124 = vmatprep.subr.bf16.mxu0 0
  %125 = vmatpush1.bf16.msra.mxu0 0
  %126 = vmatprep.subr.bf16.mxu0 0
  %127 = vmatpush1.bf16.msra.mxu0 0
  %128 = vmatprep.subr.bf16.mxu0 0
  %129 = vmatpush1.bf16.msra.mxu0 0
  %130 = vmatprep.subr.bf16.mxu0 0
  %131 = vmatpush1.bf16.msra.mxu0 0
  %132 = vmatprep.mubr.bf16.mxu0 0
  %133 = vmatmul.mubr.bf16.gmra.mrb[0].mxu0 %v50
  %v134 = vpop.f32.mrb[0].mxu0
  %v135 = vadd.f32 %v44, %v134
  %v136 = vpop.f32.mrb[0].mxu0
  %v137 = vpop.f32.mrb[0].mxu0
  %v138 = vadd.f32 %v44, %v137
  %v139 = vpop.f32.mrb[0].mxu0
  %140 = vdwg.mxu0
  %v141 = vmul.f32 %v135, 0.5
  %v142 = vmul.f32 %v138, 0.5
  %v143 = vmul.f32 %v135, 0.044715
  %v144 = vmul.f32 %v138, 0.044715
  %v145 = vmul.f32 %v143, %v135
  %v146 = vmul.f32 %v144, %v138
  %v147 = vmul.f32 %v145, %v135
  %v148 = vmul.f32 %v146, %v138
  %v149 = vadd.f32 %v135, %v147
  %v150 = vadd.f32 %v138, %v148
  %v151 = vmul.f32 %v149, 0.7978846
  %v152 = vmul.f32 %v150, 0.7978846
  %v153 = vtanh.pop %v151
  %v154 = vtanh.pop %v152
  %v155 = vadd.f32 %v153, 1.0
  %v156 = vadd.f32 %v154, 1.0
  %v157 = vmul.f32 %v141, %v155
  %v158 = vmul.f32 %v142, %v156
  %v159 = vpack.c.bf16 %v158, %v157
  %v160 = vld [vmem:[%s3] sm:$0xf]
  %v161 = vld [vmem:[%s3 + $0x4] sm:$0xf]
  %v162 = vld [vmem:[%s3 + $0x8] sm:$0xf]
  %v163 = vld [vmem:[%s3 + $0xc] sm:$0xf]
  %v164 = vld [vmem:[%s3 + $0x10] sm:$0xf]
  %v165 = vld [vmem:[%s3 + $0x14] sm:$0xf]
  %v166 = vld [vmem:[%s3 + $0x18] sm:$0xf]
  %v167 = vld [vmem:[%s3 + $0x1c] sm:$0xf]
  %v168 = vld [vmem:[%s3 + $0x20] sm:$0xf]
  %v169 = vld [vmem:[%s3 + $0x24] sm:$0xf]
  %v170 = vld [vmem:[%s3 + $0x28] sm:$0xf]
  %v171 = vld [vmem:[%s3 + $0x2c] sm:$0xf]
  %v172 = vld [vmem:[%s3 + $0x30] sm:$0xf]
  %v173 = vld [vmem:[%s3 + $0x34] sm:$0xf]
  %v174 = vld [vmem:[%s3 + $0x38] sm:$0xf]
  %v175 = vld [vmem:[%s3 + $0x3c] sm:$0xf]
  %v176 = vld [vmem:[%s4] sm:$0x1]
  %v178 = vlaneseq
  %v179 = vshrl.u32 %v178, 7
  %v180 = vsub.s32 0, %v179
  %v181 = vrot.slane %v176, %v180
  %v199 = vunpack.c.l.b16 %v160
  %v200 = vunpack.c.l.b16 %v161
  %v201 = vunpack.c.l.b16 %v162
  %v202 = vunpack.c.l.b16 %v163
  %v203 = vunpack.c.l.b16 %v164
  %v204 = vunpack.c.l.b16 %v165
  %v205 = vunpack.c.l.b16 %v166
  %v206 = vunpack.c.l.b16 %v167
  %v207 = vunpack.c.l.b16 %v168
  %v208 = vunpack.c.l.b16 %v169
  %v209 = vunpack.c.l.b16 %v170
  %v210 = vunpack.c.l.b16 %v171
  %v211 = vunpack.c.l.b16 %v172
  %v212 = vunpack.c.l.b16 %v173
  %v213 = vunpack.c.l.b16 %v174
  %v214 = vunpack.c.l.b16 %v175
  %v215 = vpack.c.b16 %v200, %v199
  %v216 = vpack.c.b16 %v202, %v201
  %v217 = vpack.c.b16 %v204, %v203
  %v218 = vpack.c.b16 %v206, %v205
  %v219 = vpack.c.b16 %v208, %v207
  %v220 = vpack.c.b16 %v210, %v209
  %v221 = vpack.c.b16 %v212, %v211
  %v222 = vpack.c.b16 %v214, %v213
  %231 = vmatprep.subr.bf16.mxu0 0
  %232 = vmatpush1.bf16.msra.mxu0 %v215
  %233 = vmatprep.subr.bf16.mxu0 0
  %234 = vmatpush1.bf16.msra.mxu0 %v216
  %235 = vmatprep.subr.bf16.mxu0 0
  %236 = vmatpush1.bf16.msra.mxu0 %v217
  %237 = vmatprep.subr.bf16.mxu0 0
  %238 = vmatpush1.bf16.msra.mxu0 %v218
  %239 = vmatprep.subr.bf16.mxu0 0
  %240 = vmatpush1.bf16.msra.mxu0 %v219
  %241 = vmatprep.subr.bf16.mxu0 0
  %242 = vmatpush1.bf16.msra.mxu0 %v220
  %243 = vmatprep.subr.bf16.mxu0 0
  %244 = vmatpush1.bf16.msra.mxu0 %v221
  %245 = vmatprep.subr.bf16.mxu0 0
  %246 = vmatpush1.bf16.msra.mxu0 %v222
  %247 = vmatprep.subr.bf16.mxu0 0
  %248 = vmatpush1.bf16.msra.mxu0 0
  %249 = vmatprep.subr.bf16.mxu0 0
  %250 = vmatpush1.bf16.msra.mxu0 0
  %251 = vmatprep.subr.bf16.mxu0 0
  %252 = vmatpush1.bf16.msra.mxu0 0
  %253 = vmatprep.subr.bf16.mxu0 0
  %254 = vmatpush1.bf16.msra.mxu0 0
  %255 = vmatprep.subr.bf16.mxu0 0
  %256 = vmatpush1.bf16.msra.mxu0 0
  %257 = vmatprep.subr.bf16.mxu0 0
  %258 = vmatpush1.bf16.msra.mxu0 0
  %259 = vmatprep.subr.bf16.mxu0 0
  %260 = vmatpush1.bf16.msra.mxu0 0
  %261 = vmatprep.subr.bf16.mxu0 0
  %262 = vmatpush1.bf16.msra.mxu0 0
  %263 = vmatprep.mubr.bf16.mxu0 0
  %264 = vmatmul.mubr.bf16.gmra.mrb[0].mxu0 %v159
  %v265 = vpop.f32.mrb[0].mxu0
  %v266 = vadd.f32 %v181, %v265
  %v267 = vpop.f32.mrb[0].mxu0
  %v268 = vpop.f32.mrb[0].mxu0
  %v269 = vadd.f32 %v181, %v268
  %v270 = vpop.f32.mrb[0].mxu0
  %271 = vdwg.mxu0
  %272 = vst [vmem:[%s5] sm:$0xff] %v266
  %273 = vst [vmem:[%s5 + $0x8] sm:$0xff] %v269
  // Predicated region
  $region22: #{pointwise_feed_forward.1} parent=0 // pred_check
    _
  $region23: #{pointwise_feed_forward.1} parent=0 // pred_check_branch
    %275 = sbr.rel (0) target = $region25
  $region24: #{pointwise_feed_forward.1} parent=0 // pred_region
    _
  $region25: #{pointwise_feed_forward.1} parent=0 // pred_fallthru
    _
  // Predicated region
  $region26: #{pointwise_feed_forward.1} parent=0 // pred_check
    _
  $region27: #{pointwise_feed_forward.1} parent=0 // pred_check_branch
    %277 = sbr.rel (0) target = $region29
  $region28: #{pointwise_feed_forward.1} parent=0 // pred_region
    _
  $region29: #{pointwise_feed_forward.1} parent=0 // pred_fallthru
    _

</llo_original>
